<compile_context>
chip_gen: v6e
topology: v6e:2x2x1
jax: 0.10.0
libtpu: 0.0.40
codegen_flags: <defaults>
</compile_context>

<pallas_src>
import functools

import numpy as np

import jax
import jax.numpy as jnp
from jax import lax
from jax.experimental import pallas as pl
from jax.experimental.pallas import tpu as pltpu


_TB = 128          # row/col tile; keeps the exp tile lane-aligned at (128, 128)
_NUM_SHARDS = 2    # "parallel" leading grid axis (2 TCs on v7x; harmless elsewhere)
_BIG = 1e30        # norm sentinel for padding rows -> exp(-BIG) == 0


def _mmd_kernel(bi_ref, bj_ref, sel_ref, zr_ref, zc_ref, nr_ref, nc_ref, o_ref,
                *, inv_sigma2, w_xx, w_yy, w_xy, tb, t_per):
    c = pl.program_id(0)
    t = pl.program_id(1)
    slot = c * t_per + t

    # Output block (one (8,128) slab per shard) stays resident across the
    # "arbitrary" t axis, so it is the accumulator.
    @pl.when(t == 0)
    def _init():
        o_ref[...] = jnp.zeros_like(o_ref)

    # Per-block weight from a small prefetched category (scalar SMEM read):
    #   0: padding slot          1: XX diagonal      2: XX off-diagonal (x2)
    #   3: YY diagonal           4: YY off-diag (x2) 5: XY cross block   (x2)
    sel = sel_ref[slot]
    w = jnp.where(sel == 1, w_xx,
        jnp.where(sel == 2, 2.0 * w_xx,
        jnp.where(sel == 3, w_yy,
        jnp.where(sel == 4, 2.0 * w_yy,
        jnp.where(sel == 5, 2.0 * w_xy, 0.0)))))

    # exp(-||z_r - z_c||^2 / (2 s^2))
    #   = exp( (z_r . z_c)/s^2 - ||z_r||^2/(2 s^2) - ||z_c||^2/(2 s^2) )
    # 1/s^2 folded into the lhs operand (O(tb*p)); norms arrive pre-scaled, so
    # the tb*tb inner loop is add + add + exp.
    a = zr_ref[...] * inv_sigma2                      # native dtype operand
    ab = lax.dot_general(a, zc_ref[...], (((1,), (1,)), ((), ())),
                         preferred_element_type=jnp.float32)   # MXU, f32 accum
    arg = ab - nr_ref[...] - nc_ref[...]              # (tb,1)/(1,tb) broadcasts
    arg = jnp.minimum(arg, 0.0)                       # squared distances >= 0
    k = jnp.exp(arg)                                  # EUP

    # Cheap per-block reduction: fold the tile into one (8,128) slab with VPU
    # adds only; defer the cross-lane reduce to the wrapper.
    slab = k[0:8, :]
    for s in range(1, tb // 8):
        slab = slab + k[s * 8:(s + 1) * 8, :]
    o_ref[...] += w * slab


def mmd(X, Y, sigma):
    """MMD(X, Y) with a Gaussian kernel of bandwidth `sigma` (scalar)."""
    n, p = X.shape
    m, p2 = Y.shape
    assert p == p2, "X and Y must share the feature dimension"
    assert n >= 2 and m >= 2, "need >= 2 samples per set (reference divides by n-1, m-1)"

    sigma = float(sigma)
    inv_sigma2 = 1.0 / (sigma * sigma)
    w_xx = 1.0 / (n * (n - 1))
    w_yy = 1.0 / (m * (m - 1))
    w_xy = -1.0 / (n * m)

    # Pad each set to a tile multiple so every block lies in one region.
    npad = -(-n // _TB) * _TB
    mpad = -(-m // _TB) * _TB
    ntot = npad + mpad
    Z = jnp.zeros((ntot, p), X.dtype)
    Z = Z.at[:n].set(X).at[npad:npad + m].set(Y)

    # Row norms, pre-scaled by 1/(2 sigma^2); BIG on padding rows -> exp == 0.
    row = jnp.arange(ntot)
    valid = (row < n) | ((row >= npad) & (row < npad + m))
    zf = Z.astype(jnp.float32)
    zn = jnp.sum(zf * zf, axis=-1) * (0.5 * inv_sigma2)
    zn = jnp.where(valid, zn, jnp.float32(_BIG))
    norms = zn[:, None]         # (ntot, 1) row-block operand
    norms_t = zn[None, :]       # (1, ntot) col-block operand (no in-kernel transpose)

    # Static upper-triangle block schedule (built at trace time).
    nb_x = npad // _TB
    nb = nb_x + mpad // _TB

    def has_data(b):
        return (b * _TB < n) if b < nb_x else ((b - nb_x) * _TB < m)

    sched = []
    for i in range(nb):
        if not has_data(i):
            continue
        for j in range(i, nb):
            if not has_data(j):
                continue
            if j < nb_x:
                cat = 1 if i == j else 2          # XX
            elif i >= nb_x:
                cat = 3 if i == j else 4          # YY
            else:
                cat = 5                           # XY (always off-diagonal)
            sched.append((i, j, cat))

    t_per = -(-len(sched) // _NUM_SHARDS)
    n_slots = _NUM_SHARDS * t_per
    bi = np.zeros((n_slots,), np.int32)
    bj = np.zeros((n_slots,), np.int32)
    bsel = np.zeros((n_slots,), np.int32)         # 0 == zero-weight padding slot
    for idx, (i, j, cat) in enumerate(sched):     # round-robin -> balanced shards
        c, t = idx % _NUM_SHARDS, idx // _NUM_SHARDS
        slot = c * t_per + t
        bi[slot], bj[slot], bsel[slot] = i, j, cat

    kernel = functools.partial(_mmd_kernel, inv_sigma2=inv_sigma2,
                               w_xx=w_xx, w_yy=w_yy, w_xy=w_xy,
                               tb=_TB, t_per=t_per)

    partials = pl.pallas_call(
        kernel,
        out_shape=jax.ShapeDtypeStruct((_NUM_SHARDS * 8, 128), jnp.float32),
        grid_spec=pltpu.PrefetchScalarGridSpec(
            num_scalar_prefetch=3,
            grid=(_NUM_SHARDS, t_per),
            in_specs=[
                pl.BlockSpec((_TB, p), lambda c, t, bi_r, bj_r, s_r: (bi_r[c * t_per + t], 0)),
                pl.BlockSpec((_TB, p), lambda c, t, bi_r, bj_r, s_r: (bj_r[c * t_per + t], 0)),
                pl.BlockSpec((_TB, 1), lambda c, t, bi_r, bj_r, s_r: (bi_r[c * t_per + t], 0)),
                pl.BlockSpec((1, _TB), lambda c, t, bi_r, bj_r, s_r: (0, bj_r[c * t_per + t])),
            ],
            out_specs=pl.BlockSpec((8, 128), lambda c, t, bi_r, bj_r, s_r: (c, 0)),
        ),
        compiler_params=pltpu.CompilerParams(
            dimension_semantics=("parallel", "arbitrary"),
            vmem_limit_bytes=32 * 1024 * 1024,
        ),
    )(jnp.asarray(bi), jnp.asarray(bj), jnp.asarray(bsel), Z, Z, norms, norms_t)

    # Final (tiny) cross-lane reduce + exact diagonal correction:
    # the reference subtracts exp(0)=1 for each of the n + m diagonal entries.
    corr = -1.0 / (n - 1) - 1.0 / (m - 1)
    return jnp.sum(partials) + corr


def _mmd_reference(X, Y, sigma):
    """Pure-JAX reference mirroring the PyTorch module exactly."""
    denom = sigma ** 2

    def gk(A, B, diagonal):
        sq = jnp.sum(jnp.abs(A[:, None, :] - B[None, :, :]) ** 2, axis=-1)
        ret = jnp.sum(jnp.exp(-sq / 2.0 / denom))
        if diagonal:
            ret -= jnp.sum(jnp.exp(-jnp.diagonal(sq) / 2.0 / denom))
        return ret

    n = X.shape[0]
    m = Y.shape[0]
    return (gk(X, X, True) / n / (n - 1)
            + gk(Y, Y, True) / m / (m - 1)
            - 2 * gk(X, Y, False) / n / m)


if __name__ == "__main__":
    key = jax.random.PRNGKey(0)
    kx, ky = jax.random.split(key)

    n, m, p = 8, 16, 32
    sigma = 1.5  # hyperparameter of the module (no learnable weights)

    X = jax.random.normal(kx, (n, p), dtype=jnp.float32)
    Y = 0.5 * jax.random.normal(ky, (m, p), dtype=jnp.float32) + 0.25

    result = jax.block_until_ready(mmd(X, Y, sigma))
    ref = jax.block_until_ready(_mmd_reference(X, Y, sigma))

    assert jnp.allclose(result, ref, rtol=1e-4, atol=1e-5), (result, ref)
    print("KERNEL_OK")
</pallas_src>

<mosaic_0001>
module attributes {stable_mosaic.version = 11 : i64} {
  func.func @_mmd_kernel(%arg0: i32, %arg1: i32, %arg2: memref<4xi32, #tpu.memory_space<smem>>, %arg3: memref<4xi32, #tpu.memory_space<smem>>, %arg4: memref<4xi32, #tpu.memory_space<smem>>, %arg5: memref<128x32xf32, #tpu.memory_space<vmem>>, %arg6: memref<128x32xf32, #tpu.memory_space<vmem>>, %arg7: memref<128x1xf32, #tpu.memory_space<vmem>>, %arg8: memref<1x128xf32, #tpu.memory_space<vmem>>, %arg9: memref<8x128xf32, #tpu.memory_space<vmem>>) attributes {dimension_semantics = [#tpu.dimension_semantics<parallel>, #tpu.dimension_semantics<arbitrary>], iteration_bounds = array<i64: 2, 2>, scalar_prefetch = 3 : i64, scratch_operands = 0 : i64, tpu.core_type = #tpu.core_type<tc>, window_params = [{transform_indices = @transform_0, window_bounds = array<i64: 128, 32>}, {transform_indices = @transform_1, window_bounds = array<i64: 128, 32>}, {transform_indices = @transform_2, window_bounds = array<i64: 128, 1>}, {transform_indices = @transform_3, window_bounds = array<i64: 1, 128>}, {transform_indices = @transform_4, window_bounds = array<i64: 8, 128>}]} {
    %c2_i32 = arith.constant 2 : i32
    %0 = arith.muli %arg0, %c2_i32 : i32
    %1 = arith.addi %0, %arg1 : i32
    %c0_i32 = arith.constant 0 : i32
    %2 = arith.cmpi eq, %arg1, %c0_i32 : i32
    %3 = arith.extui %2 : i1 to i32
    %c0_i32_0 = arith.constant 0 : i32
    %4 = arith.cmpi ne, %3, %c0_i32_0 : i32
    scf.if %4 {
      %cst_21 = arith.constant 0.000000e+00 : f32
      %67 = vector.broadcast %cst_21 : f32 to vector<8x128xf32>
      %c0_22 = arith.constant 0 : index
      %c0_23 = arith.constant 0 : index
      %68 = vector.load %arg9[%c0_22, %c0_23] : memref<8x128xf32, #tpu.memory_space<vmem>>, vector<8x128xf32>
      tpu.vector_store %arg9[%c0_22, %c0_23], %67 {strides = array<i32>} : memref<8x128xf32, #tpu.memory_space<vmem>>, vector<8x128xf32>,
    } else {
    }
    %5 = arith.index_cast %1 : i32 to index
    %6 = memref.load %arg4[%5] : memref<4xi32, #tpu.memory_space<smem>>
    %c1_i32 = arith.constant 1 : i32
    %7 = arith.cmpi eq, %6, %c1_i32 : i32
    %c2_i32_1 = arith.constant 2 : i32
    %8 = arith.cmpi eq, %6, %c2_i32_1 : i32
    %c3_i32 = arith.constant 3 : i32
    %9 = arith.cmpi eq, %6, %c3_i32 : i32
    %c4_i32 = arith.constant 4 : i32
    %10 = arith.cmpi eq, %6, %c4_i32 : i32
    %c5_i32 = arith.constant 5 : i32
    %11 = arith.cmpi eq, %6, %c5_i32 : i32
    %cst = arith.constant -1.562500e-02 : f32
    %cst_2 = arith.constant 0.000000e+00 : f32
    %12 = arith.select %11, %cst, %cst_2 : f32
    %cst_3 = arith.constant 0.00833333377 : f32
    %13 = arith.select %10, %cst_3, %12 : f32
    %cst_4 = arith.constant 0.00416666688 : f32
    %14 = arith.select %9, %cst_4, %13 : f32
    %cst_5 = arith.constant 0.0357142873 : f32
    %15 = arith.select %8, %cst_5, %14 : f32
    %cst_6 = arith.constant 0.0178571437 : f32
    %16 = arith.select %7, %cst_6, %15 : f32
    %c0 = arith.constant 0 : index
    %c0_7 = arith.constant 0 : index
    %17 = vector.load %arg5[%c0, %c0_7] : memref<128x32xf32, #tpu.memory_space<vmem>>, vector<128x32xf32>
    %cst_8 = arith.constant 0.444444448 : f32
    %18 = vector.broadcast %cst_8 : f32 to vector<128x32xf32>
    %19 = arith.mulf %17, %18 : vector<128x32xf32>
    %c0_9 = arith.constant 0 : index
    %c0_10 = arith.constant 0 : index
    %20 = vector.load %arg6[%c0_9, %c0_10] : memref<128x32xf32, #tpu.memory_space<vmem>>, vector<128x32xf32>
    %cst_11 = arith.constant dense<0.000000e+00> : vector<128x128xf32>
    %21 = tpu.matmul %19, %20, %cst_11 {dimension_numbers = #tpu.dot_dimension_numbers<[1], [1], [0], [0], [0, 0, 1, 0], [], []>} : vector<128x32xf32>, vector<128x32xf32>, vector<128x128xf32> -> vector<128x128xf32>
    %c0_12 = arith.constant 0 : index
    %c0_13 = arith.constant 0 : index
    %22 = vector.load %arg7[%c0_12, %c0_13] : memref<128x1xf32, #tpu.memory_space<vmem>>, vector<128x1xf32>
    %23 = vector.broadcast %22 : vector<128x1xf32> to vector<128x128xf32>
    %24 = arith.subf %21, %23 : vector<128x128xf32>
    %c0_14 = arith.constant 0 : index
    %c0_15 = arith.constant 0 : index
    %25 = vector.load %arg8[%c0_14, %c0_15] : memref<1x128xf32, #tpu.memory_space<vmem>>, vector<1x128xf32>
    %26 = vector.broadcast %25 : vector<1x128xf32> to vector<128x128xf32>
    %27 = arith.subf %24, %26 : vector<128x128xf32>
    %cst_16 = arith.constant 0.000000e+00 : f32
    %28 = vector.broadcast %cst_16 : f32 to vector<128x128xf32>
    %29 = arith.minimumf %27, %28 : vector<128x128xf32>
    %30 = math.exp %29 : vector<128x128xf32>
    %31 = vector.extract_strided_slice %30 {offsets = [0, 0], sizes = [8, 128], strides = [1, 1]} : vector<128x128xf32> to vector<8x128xf32>
    %32 = vector.extract_strided_slice %30 {offsets = [8, 0], sizes = [8, 128], strides = [1, 1]} : vector<128x128xf32> to vector<8x128xf32>
    %33 = arith.addf %31, %32 : vector<8x128xf32>
    %34 = vector.extract_strided_slice %30 {offsets = [16, 0], sizes = [8, 128], strides = [1, 1]} : vector<128x128xf32> to vector<8x128xf32>
    %35 = arith.addf %33, %34 : vector<8x128xf32>
    %36 = vector.extract_strided_slice %30 {offsets = [24, 0], sizes = [8, 128], strides = [1, 1]} : vector<128x128xf32> to vector<8x128xf32>
    %37 = arith.addf %35, %36 : vector<8x128xf32>
    %38 = vector.extract_strided_slice %30 {offsets = [32, 0], sizes = [8, 128], strides = [1, 1]} : vector<128x128xf32> to vector<8x128xf32>
    %39 = arith.addf %37, %38 : vector<8x128xf32>
    %40 = vector.extract_strided_slice %30 {offsets = [40, 0], sizes = [8, 128], strides = [1, 1]} : vector<128x128xf32> to vector<8x128xf32>
    %41 = arith.addf %39, %40 : vector<8x128xf32>
    %42 = vector.extract_strided_slice %30 {offsets = [48, 0], sizes = [8, 128], strides = [1, 1]} : vector<128x128xf32> to vector<8x128xf32>
    %43 = arith.addf %41, %42 : vector<8x128xf32>
    %44 = vector.extract_strided_slice %30 {offsets = [56, 0], sizes = [8, 128], strides = [1, 1]} : vector<128x128xf32> to vector<8x128xf32>
    %45 = arith.addf %43, %44 : vector<8x128xf32>
    %46 = vector.extract_strided_slice %30 {offsets = [64, 0], sizes = [8, 128], strides = [1, 1]} : vector<128x128xf32> to vector<8x128xf32>
    %47 = arith.addf %45, %46 : vector<8x128xf32>
    %48 = vector.extract_strided_slice %30 {offsets = [72, 0], sizes = [8, 128], strides = [1, 1]} : vector<128x128xf32> to vector<8x128xf32>
    %49 = arith.addf %47, %48 : vector<8x128xf32>
    %50 = vector.extract_strided_slice %30 {offsets = [80, 0], sizes = [8, 128], strides = [1, 1]} : vector<128x128xf32> to vector<8x128xf32>
    %51 = arith.addf %49, %50 : vector<8x128xf32>
    %52 = vector.extract_strided_slice %30 {offsets = [88, 0], sizes = [8, 128], strides = [1, 1]} : vector<128x128xf32> to vector<8x128xf32>
    %53 = arith.addf %51, %52 : vector<8x128xf32>
    %54 = vector.extract_strided_slice %30 {offsets = [96, 0], sizes = [8, 128], strides = [1, 1]} : vector<128x128xf32> to vector<8x128xf32>
    %55 = arith.addf %53, %54 : vector<8x128xf32>
    %56 = vector.extract_strided_slice %30 {offsets = [104, 0], sizes = [8, 128], strides = [1, 1]} : vector<128x128xf32> to vector<8x128xf32>
    %57 = arith.addf %55, %56 : vector<8x128xf32>
    %58 = vector.extract_strided_slice %30 {offsets = [112, 0], sizes = [8, 128], strides = [1, 1]} : vector<128x128xf32> to vector<8x128xf32>
    %59 = arith.addf %57, %58 : vector<8x128xf32>
    %60 = vector.extract_strided_slice %30 {offsets = [120, 0], sizes = [8, 128], strides = [1, 1]} : vector<128x128xf32> to vector<8x128xf32>
    %61 = arith.addf %59, %60 : vector<8x128xf32>
    %c0_17 = arith.constant 0 : index
    %c0_18 = arith.constant 0 : index
    %62 = vector.load %arg9[%c0_17, %c0_18] : memref<8x128xf32, #tpu.memory_space<vmem>>, vector<8x128xf32>
    %63 = vector.broadcast %16 : f32 to vector<8x128xf32>
    %64 = arith.mulf %63, %61 : vector<8x128xf32>
    %65 = arith.addf %62, %64 : vector<8x128xf32>
    %c0_19 = arith.constant 0 : index
    %c0_20 = arith.constant 0 : index
    %66 = vector.load %arg9[%c0_19, %c0_20] : memref<8x128xf32, #tpu.memory_space<vmem>>, vector<8x128xf32>
    tpu.vector_store %arg9[%c0_19, %c0_20], %65 {strides = array<i32>} : memref<8x128xf32, #tpu.memory_space<vmem>>, vector<8x128xf32>,
    return
  }
  func.func @transform_0(%arg0: i32, %arg1: i32, %arg2: memref<4xi32, #tpu.memory_space<smem>>, %arg3: memref<4xi32, #tpu.memory_space<smem>>, %arg4: memref<4xi32, #tpu.memory_space<smem>>) -> (i32, i32) {
    %c2_i32 = arith.constant 2 : i32
    %0 = arith.muli %arg0, %c2_i32 : i32
    %1 = arith.addi %0, %arg1 : i32
    %2 = arith.index_cast %1 : i32 to index
    %3 = memref.load %arg2[%2] : memref<4xi32, #tpu.memory_space<smem>>
    %c0_i32 = arith.constant 0 : i32
    %c0_i32_0 = arith.constant 0 : i32
    return %3, %c0_i32 : i32, i32
  }
  func.func @transform_1(%arg0: i32, %arg1: i32, %arg2: memref<4xi32, #tpu.memory_space<smem>>, %arg3: memref<4xi32, #tpu.memory_space<smem>>, %arg4: memref<4xi32, #tpu.memory_space<smem>>) -> (i32, i32) {
    %c2_i32 = arith.constant 2 : i32
    %0 = arith.muli %arg0, %c2_i32 : i32
    %1 = arith.addi %0, %arg1 : i32
    %2 = arith.index_cast %1 : i32 to index
    %3 = memref.load %arg3[%2] : memref<4xi32, #tpu.memory_space<smem>>
    %c0_i32 = arith.constant 0 : i32
    %c0_i32_0 = arith.constant 0 : i32
    return %3, %c0_i32 : i32, i32
  }
  func.func @transform_2(%arg0: i32, %arg1: i32, %arg2: memref<4xi32, #tpu.memory_space<smem>>, %arg3: memref<4xi32, #tpu.memory_space<smem>>, %arg4: memref<4xi32, #tpu.memory_space<smem>>) -> (i32, i32) {
    %c2_i32 = arith.constant 2 : i32
    %0 = arith.muli %arg0, %c2_i32 : i32
    %1 = arith.addi %0, %arg1 : i32
    %2 = arith.index_cast %1 : i32 to index
    %3 = memref.load %arg2[%2] : memref<4xi32, #tpu.memory_space<smem>>
    %c0_i32 = arith.constant 0 : i32
    %c0_i32_0 = arith.constant 0 : i32
    return %3, %c0_i32 : i32, i32
  }
  func.func @transform_3(%arg0: i32, %arg1: i32, %arg2: memref<4xi32, #tpu.memory_space<smem>>, %arg3: memref<4xi32, #tpu.memory_space<smem>>, %arg4: memref<4xi32, #tpu.memory_space<smem>>) -> (i32, i32) {
    %c2_i32 = arith.constant 2 : i32
    %0 = arith.muli %arg0, %c2_i32 : i32
    %1 = arith.addi %0, %arg1 : i32
    %2 = arith.index_cast %1 : i32 to index
    %3 = memref.load %arg3[%2] : memref<4xi32, #tpu.memory_space<smem>>
    %c0_i32 = arith.constant 0 : i32
    %c0_i32_0 = arith.constant 0 : i32
    return %c0_i32, %3 : i32, i32
  }
  func.func @transform_4(%arg0: i32, %arg1: i32, %arg2: memref<4xi32, #tpu.memory_space<smem>>, %arg3: memref<4xi32, #tpu.memory_space<smem>>, %arg4: memref<4xi32, #tpu.memory_space<smem>>) -> (i32, i32) {
    %c0_i32 = arith.constant 0 : i32
    %c0_i32_0 = arith.constant 0 : i32
    return %arg0, %c0_i32 : i32, i32
  }
}

</mosaic_0001>

<llo_original>
// kernel: tpu_custom_call.1
$region0: #{tpu_custom_call.1}
  #allocation0 [shape = 'u32[]', space=smem, size = 0x4, offset = 0x4, fixed_abs, tag = 'smem constant byte address 0x4 - core index']
  #allocation1 [shape = 'u32[144,128]{1,0:T(1,128)}', space=vmem, size = 0x12000, scoped, tag = 'internal scratch']
  #allocation2 [shape = 's32[1]{0}', space=sflag, size = 0x4, scoped, tag = 'scoped memory for tpu_custom_call.1']
  #allocation3 [shape = 'u8[512]{0}', space=smem, size = 0x200, scoped, tag = 'prefetched SMEM operand 0']
  #allocation4 [shape = 'u8[512]{0}', space=smem, size = 0x200, scoped, tag = 'prefetched SMEM operand 1']
  #allocation5 [shape = 'u8[512]{0}', space=smem, size = 0x200, scoped, tag = 'prefetched SMEM operand 2']
  %s0 = inlined_call_operand.vmem [shape: s32[4], index: 0, kind: input, shape index: {}]
  %s1 = inlined_call_operand.vmem [shape: s32[4], index: 1, kind: input, shape index: {}]
  %s2 = inlined_call_operand.vmem [shape: s32[4], index: 2, kind: input, shape index: {}]
  %s3 = inlined_call_operand.vmem [shape: f32[256,32], index: 3, kind: input, shape index: {}]
  %s4 = inlined_call_operand.vmem [shape: f32[256,32], index: 4, kind: input, shape index: {}]
  %s5 = inlined_call_operand.vmem [shape: f32[256,1], index: 5, kind: input, shape index: {}]
  %s6 = inlined_call_operand.vmem [shape: f32[1,256], index: 6, kind: input, shape index: {}]
  %s7 = inlined_call_operand.hbm [shape: f32[16,128], index: 7, kind: output, shape index: {}]
  %s8 = sld [smem:[#allocation0]]
  $region53: #{tpu_custom_call.1} parent=0
    _
  %s10 = ssub.s32 1, %s8
  %s11 = scalar_select 0, %s10, %s8
  %s12 = sshll.u32 %s0, 4
  %s13 = int_to_ptr.vmem [resolvable:$true] %s12
  %15 = dma.vmem_to_smem %s13, 16, [#allocation3], [#allocation2]
  %s16 = sshll.u32 %s1, 4
  %s17 = int_to_ptr.vmem [resolvable:$true] %s16
  %19 = dma.vmem_to_smem %s17, 16, [#allocation4], [#allocation2]
  %s20 = sshll.u32 %s2, 4
  %s21 = int_to_ptr.vmem [resolvable:$true] %s20
  %23 = dma.vmem_to_smem %s21, 16, [#allocation5], [#allocation2]
  %24 = dma.done [#allocation2], 48
  %25 = sfence
  $region1: #{tpu_custom_call.1} parent=0
    #allocation6 [shape = 'u8[8192]{0}', space=vmem, size = 0x2000, scoped, tag = 'output window, operand 0']
    #allocation7 [shape = 's32[2]{0}', space=sflag, size = 0x8, scoped, tag = 'scoped memory for tpu_custom_call.1']
    %26 = vsyncpa [#allocation7], 0
    %s27 = scalar_lea.sflag [#allocation7], 1
    %28 = vsyncpa %s27, 0
    loop: start=0, step=1, limit=6
    $region2: #{tpu_custom_call.1} parent=1 // loop_pre_header
      _
    $region3: #{tpu_custom_call.1} parent=1 // loop_header
      %s30 = sphi 0, %s34
      %p31 = scmp.ge.s32.totalorder %s30, 6
      %s37 = sphi 0, %s49
      %s38 = sphi 0, %s45
      %s39 = sphi 0, %s37
      %s40 = sphi 0, %s38
      %s41 = sphi 0, %s39
      %s42 = sphi 0, %s40
      %s58 = sphi 0, %s60
      %s61 = sphi 0, %s58
      %s62 = sphi 0, %s61
      %s78 = sphi 0, %s62
      %s90 = sphi 0, %s92
      %s93 = sphi 0, %s90
      %s94 = sphi 0, %s93
      %s110 = sphi 0, %s94
      %s122 = sphi 0, %s124
      %s125 = sphi 0, %s122
      %s126 = sphi 0, %s125
      %s142 = sphi 0, %s126
      %s154 = sphi 0, %s156
      %s157 = sphi 0, %s154
      %s158 = sphi 0, %s157
      %s174 = sphi 0, %s158
      %s180 = sphi 0, %s182
      %s183 = sphi 0, %s180
      %s184 = sphi 0, %s183
      %s200 = sphi 0, %s184
    $region4: #{tpu_custom_call.1} parent=1 // loop_header_branch
      %33 = sbr.rel (%p31) target = $region8
    $region5: #{tpu_custom_call.1} parent=1 // loop_body
      %s35 = ssub.s32 %s30, 1
      %s36 = ssub.s32 %s30, 2
      %s43 = sadd.s32 1, %s38
      %p44 = scmp.ge.s32.totalorder %s43, 2
      %s45 = scalar_select %p44, 0, %s43
      %s46 = sadd.s32 1, %s37
      %s47 = scalar_select %p44, %s46, %s37
      %p48 = scmp.ge.s32.totalorder %s47, 2
      %s49 = scalar_select %p48, 0, %s47
      %s50 = smul.u32 %s37, 2
      %s51 = sadd.s32 %s50, %s38
      %s52 = sld [smem:[#allocation3 + %s51]]
      %s53 = smul.u32 %s49, 2
      %s54 = sadd.s32 %s53, %s45
      %s55 = sld [smem:[#allocation3 + %s54]]
      %s56 = ssub.s32 %s52, %s55
      %p57 = scmp.eq.s32.totalorder %s56, 0
      %s59 = sadd.s32 %s58, 1
      %s60 = scalar_select %p57, %s58, %s59
      %p63 = pneg %p57
      %p64 = scmp.eq.s32.totalorder %s30, 3
      %p65 = por %p63, %p64
      %p66 = scmp.ne.s32.totalorder %s58, %s61
      %p67 = scmp.eq.s32.totalorder %s30, 0
      %p68 = por %p66, %p67
      %p69 = scmp.ne.s32.totalorder %s58, %s61
      %p70 = scmp.eq.s32.totalorder %s35, 3
      %p71 = por %p69, %p70
      %p72 = scmp.ne.s32.totalorder %s61, %s62
      %p73 = scmp.eq.s32.totalorder %s35, 0
      %p74 = por %p72, %p73
      %p75 = scmp.ne.s32.totalorder %s61, %s62
      %p76 = scmp.eq.s32.totalorder %s36, 3
      %p77 = por %p75, %p76
      %p79 = scmp.ne.s32.totalorder %s62, %s78
      %p80 = scmp.eq.s32.totalorder %s36, 0
      %p81 = por %p79, %p80
      %s82 = smul.u32 %s37, 2
      %s83 = sadd.s32 %s82, %s38
      %s84 = sld [smem:[#allocation4 + %s83]]
      %s85 = smul.u32 %s49, 2
      %s86 = sadd.s32 %s85, %s45
      %s87 = sld [smem:[#allocation4 + %s86]]
      %s88 = ssub.s32 %s84, %s87
      %p89 = scmp.eq.s32.totalorder %s88, 0
      %s91 = sadd.s32 %s90, 1
      %s92 = scalar_select %p89, %s90, %s91
      %p95 = pneg %p89
      %p96 = scmp.eq.s32.totalorder %s30, 3
      %p97 = por %p95, %p96
      %p98 = scmp.ne.s32.totalorder %s90, %s93
      %p99 = scmp.eq.s32.totalorder %s30, 0
      %p100 = por %p98, %p99
      %p101 = scmp.ne.s32.totalorder %s90, %s93
      %p102 = scmp.eq.s32.totalorder %s35, 3
      %p103 = por %p101, %p102
      %p104 = scmp.ne.s32.totalorder %s93, %s94
      %p105 = scmp.eq.s32.totalorder %s35, 0
      %p106 = por %p104, %p105
      %p107 = scmp.ne.s32.totalorder %s93, %s94
      %p108 = scmp.eq.s32.totalorder %s36, 3
      %p109 = por %p107, %p108
      %p111 = scmp.ne.s32.totalorder %s94, %s110
      %p112 = scmp.eq.s32.totalorder %s36, 0
      %p113 = por %p111, %p112
      %s114 = smul.u32 %s37, 2
      %s115 = sadd.s32 %s114, %s38
      %s116 = sld [smem:[#allocation3 + %s115]]
      %s117 = smul.u32 %s49, 2
      %s118 = sadd.s32 %s117, %s45
      %s119 = sld [smem:[#allocation3 + %s118]]
      %s120 = ssub.s32 %s116, %s119
      %p121 = scmp.eq.s32.totalorder %s120, 0
      %s123 = sadd.s32 %s122, 1
      %s124 = scalar_select %p121, %s122, %s123
      %p127 = pneg %p121
      %p128 = scmp.eq.s32.totalorder %s30, 3
      %p129 = por %p127, %p128
      %p130 = scmp.ne.s32.totalorder %s122, %s125
      %p131 = scmp.eq.s32.totalorder %s30, 0
      %p132 = por %p130, %p131
      %p133 = scmp.ne.s32.totalorder %s122, %s125
      %p134 = scmp.eq.s32.totalorder %s35, 3
      %p135 = por %p133, %p134
      %p136 = scmp.ne.s32.totalorder %s125, %s126
      %p137 = scmp.eq.s32.totalorder %s35, 0
      %p138 = por %p136, %p137
      %p139 = scmp.ne.s32.totalorder %s125, %s126
      %p140 = scmp.eq.s32.totalorder %s36, 3
      %p141 = por %p139, %p140
      %p143 = scmp.ne.s32.totalorder %s126, %s142
      %p144 = scmp.eq.s32.totalorder %s36, 0
      %p145 = por %p143, %p144
      %s146 = smul.u32 %s37, 2
      %s147 = sadd.s32 %s146, %s38
      %s148 = sld [smem:[#allocation4 + %s147]]
      %s149 = smul.u32 %s49, 2
      %s150 = sadd.s32 %s149, %s45
      %s151 = sld [smem:[#allocation4 + %s150]]
      %s152 = ssub.s32 %s148, %s151
      %p153 = scmp.eq.s32.totalorder %s152, 0
      %s155 = sadd.s32 %s154, 1
      %s156 = scalar_select %p153, %s154, %s155
      %p159 = pneg %p153
      %p160 = scmp.eq.s32.totalorder %s30, 3
      %p161 = por %p159, %p160
      %p162 = scmp.ne.s32.totalorder %s154, %s157
      %p163 = scmp.eq.s32.totalorder %s30, 0
      %p164 = por %p162, %p163
      %p165 = scmp.ne.s32.totalorder %s154, %s157
      %p166 = scmp.eq.s32.totalorder %s35, 3
      %p167 = por %p165, %p166
      %p168 = scmp.ne.s32.totalorder %s157, %s158
      %p169 = scmp.eq.s32.totalorder %s35, 0
      %p170 = por %p168, %p169
      %p171 = scmp.ne.s32.totalorder %s157, %s158
      %p172 = scmp.eq.s32.totalorder %s36, 3
      %p173 = por %p171, %p172
      %p175 = scmp.ne.s32.totalorder %s158, %s174
      %p176 = scmp.eq.s32.totalorder %s36, 0
      %p177 = por %p175, %p176
      %s178 = ssub.s32 %s37, %s49
      %p179 = scmp.eq.s32.totalorder %s178, 0
      %s181 = sadd.s32 %s180, 1
      %s182 = scalar_select %p179, %s180, %s181
      %p185 = pneg %p179
      %p186 = scmp.eq.s32.totalorder %s30, 3
      %p187 = por %p185, %p186
      %p188 = scmp.ne.s32.totalorder %s180, %s183
      %p189 = scmp.eq.s32.totalorder %s30, 0
      %p190 = por %p188, %p189
      %p191 = scmp.ne.s32.totalorder %s180, %s183
      %p192 = scmp.eq.s32.totalorder %s35, 3
      %p193 = por %p191, %p192
      %p194 = scmp.ne.s32.totalorder %s183, %s184
      %p195 = scmp.eq.s32.totalorder %s35, 0
      %p196 = por %p194, %p195
      %p197 = scmp.ne.s32.totalorder %s183, %s184
      %p198 = scmp.eq.s32.totalorder %s36, 3
      %p199 = por %p197, %p198
      %p201 = scmp.ne.s32.totalorder %s184, %s200
      %p202 = scmp.eq.s32.totalorder %s36, 0
      %p203 = por %p201, %p202
      %p204 = scmp.le.s32.totalorder 1, %s30
      %p205 = scmp.lt.s32.totalorder %s30, 5
      %p206 = pnand %p204, %p205
      %p207 = pneg %p206
      // Predicated region
      $region9: #{tpu_custom_call.1} parent=5 // pred_check
        _
      $region10: #{tpu_custom_call.1} parent=5 // pred_check_branch
        %209 = sbr.rel (%p206) target = $region12
      $region11: #{tpu_custom_call.1} parent=5 // pred_region
        %s210 = ssub.s32 %s30, 1
      $region12: #{tpu_custom_call.1} parent=5 // pred_fallthru
        _
      %p211 = scmp.lt.s32.totalorder %s30, 4
      // Predicated region
      $region13: #{tpu_custom_call.1} parent=5 // pred_check
        %p212 = pneg %p211
      $region14: #{tpu_custom_call.1} parent=5 // pred_check_branch
        %214 = sbr.rel (%p212) target = $region16
      $region15: #{tpu_custom_call.1} parent=5 // pred_region
        // Predicated region
        $region17: #{tpu_custom_call.1} parent=15 // pred_check
          %p215 = pneg %p68
        $region18: #{tpu_custom_call.1} parent=15 // pred_check_branch
          %217 = sbr.rel (%p215) target = $region20
        $region19: #{tpu_custom_call.1} parent=15 // pred_region
          %s218 = smul.u32 %s37, 2
          %s219 = sadd.s32 %s218, %s38
          %s220 = sld [smem:[#allocation3 + %s219]]
          %s221 = smul.u32 16, %s220
          %p222 = scmp.lt.s32.totalorder %s221, 31
          %s223 = scalar_select %p222, %s221, 31
          %s224 = smul.addr %s223, 8
          %s225 = scalar_lea.vmem %s3, %s224
          %s226 = smul.u32 %s37, 2
          %s227 = sadd.s32 %s226, %s38
          %s228 = sld [smem:[#allocation3 + %s227]]
          %s229 = smul.u32 16, %s228
        $region20: #{tpu_custom_call.1} parent=15 // pred_fallthru
          _
        // Predicated region
        $region21: #{tpu_custom_call.1} parent=15 // pred_check
          %p230 = pneg %p100
        $region22: #{tpu_custom_call.1} parent=15 // pred_check_branch
          %232 = sbr.rel (%p230) target = $region24
        $region23: #{tpu_custom_call.1} parent=15 // pred_region
          %s233 = smul.u32 %s37, 2
          %s234 = sadd.s32 %s233, %s38
          %s235 = sld [smem:[#allocation4 + %s234]]
          %s236 = smul.u32 16, %s235
          %p237 = scmp.lt.s32.totalorder %s236, 31
          %s238 = scalar_select %p237, %s236, 31
          %s239 = smul.addr %s238, 8
          %s240 = scalar_lea.vmem %s4, %s239
          %s241 = smul.u32 %s37, 2
          %s242 = sadd.s32 %s241, %s38
          %s243 = sld [smem:[#allocation4 + %s242]]
          %s244 = smul.u32 16, %s243
        $region24: #{tpu_custom_call.1} parent=15 // pred_fallthru
          _
        // Predicated region
        $region25: #{tpu_custom_call.1} parent=15 // pred_check
          %p245 = pneg %p132
        $region26: #{tpu_custom_call.1} parent=15 // pred_check_branch
          %247 = sbr.rel (%p245) target = $region28
        $region27: #{tpu_custom_call.1} parent=15 // pred_region
          %s248 = smul.u32 %s37, 2
          %s249 = sadd.s32 %s248, %s38
          %s250 = sld [smem:[#allocation3 + %s249]]
          %s251 = smul.u32 16, %s250
          %p252 = scmp.lt.s32.totalorder %s251, 31
          %s253 = scalar_select %p252, %s251, 31
          %s254 = smul.addr %s253, 8
          %s255 = scalar_lea.vmem %s5, %s254
          %s256 = smul.u32 %s37, 2
          %s257 = sadd.s32 %s256, %s38
          %s258 = sld [smem:[#allocation3 + %s257]]
          %s259 = smul.u32 16, %s258
        $region28: #{tpu_custom_call.1} parent=15 // pred_fallthru
          _
        // Predicated region
        $region29: #{tpu_custom_call.1} parent=15 // pred_check
          %p260 = pneg %p164
        $region30: #{tpu_custom_call.1} parent=15 // pred_check_branch
          %262 = sbr.rel (%p260) target = $region32
        $region31: #{tpu_custom_call.1} parent=15 // pred_region
          %s263 = smul.u32 %s37, 2
          %s264 = sadd.s32 %s263, %s38
          %s265 = sld [smem:[#allocation4 + %s264]]
          %p266 = scmp.lt.s32.totalorder %s265, 1
          %s267 = scalar_select %p266, %s265, 1
          %s268 = scalar_lea.vmem %s6, %s267
          %s269 = smul.u32 %s37, 2
          %s270 = sadd.s32 %s269, %s38
          %s271 = sld [smem:[#allocation4 + %s270]]
        $region32: #{tpu_custom_call.1} parent=15 // pred_fallthru
          _
      $region16: #{tpu_custom_call.1} parent=5 // pred_fallthru
        _
      %p272 = scmp.le.s32.totalorder 1, %s30
      %p273 = scmp.lt.s32.totalorder %s30, 5
      %p274 = pnand %p272, %p273
      %p275 = pneg %p274
      // Predicated region
      $region33: #{tpu_custom_call.1} parent=5 // pred_check
        _
      $region34: #{tpu_custom_call.1} parent=5 // pred_check_branch
        %277 = sbr.rel (%p274) target = $region36
      $region35: #{tpu_custom_call.1} parent=5 // pred_region
        %s278 = ssub.s32 %s30, 1
        %s279 = smul.u32 %s39, 2
        %s280 = sadd.s32 %s279, %s40
        %s281 = sld [smem:[#allocation3 + %s280]]
        %s282 = smul.u32 16, %s281
        %p283 = scmp.lt.s32.totalorder %s282, 31
        %s284 = scalar_select %p283, %s282, 31
        %s285 = smul.addr %s284, 8
        %s286 = scalar_lea.vmem %s3, %s285
        %p287 = pneg %p74
        %p288 = pneg %p71
        %s289 = smul.u32 %s39, 2
        %s290 = sadd.s32 %s289, %s40
        %s291 = sld [smem:[#allocation4 + %s290]]
        %s292 = smul.u32 16, %s291
        %p293 = scmp.lt.s32.totalorder %s292, 31
        %s294 = scalar_select %p293, %s292, 31
        %s295 = smul.addr %s294, 8
        %s296 = scalar_lea.vmem %s4, %s295
        %p297 = pneg %p106
        %p298 = pneg %p103
        %s299 = smul.u32 %s39, 2
        %s300 = sadd.s32 %s299, %s40
        %s301 = sld [smem:[#allocation3 + %s300]]
        %s302 = smul.u32 16, %s301
        %p303 = scmp.lt.s32.totalorder %s302, 31
        %s304 = scalar_select %p303, %s302, 31
        %s305 = smul.addr %s304, 8
        %s306 = scalar_lea.vmem %s5, %s305
        %p307 = pneg %p138
        %p308 = pneg %p135
        %s309 = smul.u32 %s39, 2
        %s310 = sadd.s32 %s309, %s40
        %s311 = sld [smem:[#allocation4 + %s310]]
        %p312 = scmp.lt.s32.totalorder %s311, 1
        %s313 = scalar_select %p312, %s311, 1
        %s314 = scalar_lea.vmem %s6, %s313
        %p315 = pneg %p170
        %p316 = pneg %p167
        %p317 = pneg %p196
        %p318 = pneg %p193
        %s319 = sand.u32 %s183, 1
        %s320 = scalar_lea.sflag [#allocation7], %s319
        %s321 = sand.u32 %s183, 1
        %s322 = smul.addr %s321, 8
        %s323 = scalar_lea.vmem [#allocation6], %s322
        %s324 = smul.u32 %s39, 2
        %s325 = sadd.s32 %s324, %s40
        %s326 = sld [smem:[#allocation3 + %s325]]
        %s327 = smul.u32 16, %s326
        %p328 = scmp.lt.s32.totalorder %s327, 31
        %s329 = scalar_select %p328, %s327, 31
        %s330 = smul.addr %s329, 8
        %s331 = scalar_lea.vmem %s3, %s330
        %s332 = smul.u32 %s39, 2
        %s333 = sadd.s32 %s332, %s40
        %s334 = sld [smem:[#allocation3 + %s333]]
        %s335 = smul.u32 16, %s334
        %s336 = smul.u32 %s39, 2
        %s337 = sadd.s32 %s336, %s40
        %s338 = sld [smem:[#allocation4 + %s337]]
        %s339 = smul.u32 16, %s338
        %p340 = scmp.lt.s32.totalorder %s339, 31
        %s341 = scalar_select %p340, %s339, 31
        %s342 = smul.addr %s341, 8
        %s343 = scalar_lea.vmem %s4, %s342
        %s344 = smul.u32 %s39, 2
        %s345 = sadd.s32 %s344, %s40
        %s346 = sld [smem:[#allocation4 + %s345]]
        %s347 = smul.u32 16, %s346
        %s348 = smul.u32 %s39, 2
        %s349 = sadd.s32 %s348, %s40
        %s350 = sld [smem:[#allocation3 + %s349]]
        %s351 = smul.u32 16, %s350
        %p352 = scmp.lt.s32.totalorder %s351, 31
        %s353 = scalar_select %p352, %s351, 31
        %s354 = smul.addr %s353, 8
        %s355 = scalar_lea.vmem %s5, %s354
        %s356 = smul.u32 %s39, 2
        %s357 = sadd.s32 %s356, %s40
        %s358 = sld [smem:[#allocation3 + %s357]]
        %s359 = smul.u32 16, %s358
        %s360 = smul.u32 %s39, 2
        %s361 = sadd.s32 %s360, %s40
        %s362 = sld [smem:[#allocation4 + %s361]]
        %p363 = scmp.lt.s32.totalorder %s362, 1
        %s364 = scalar_select %p363, %s362, 1
        %s365 = scalar_lea.vmem %s6, %s364
        %s366 = smul.u32 %s39, 2
        %s367 = sadd.s32 %s366, %s40
        %s368 = sld [smem:[#allocation4 + %s367]]
        %s369 = smul.u32 %s39, 2
        %s370 = sadd.s32 %s369, %s40
        %p371 = scmp.eq.s32.totalorder %s40, 0
        // Predicated region
        $region37: #{tpu_custom_call.1} parent=35 // pred_check
          %p372 = pneg %p371
        $region38: #{tpu_custom_call.1} parent=35 // pred_check_branch
          %374 = sbr.rel (%p372) target = $region40
        $region39: #{tpu_custom_call.1} parent=35 // pred_region
          %375 = vst [vmem:[%s323] sm:$0xff] 0.0
        $region40: #{tpu_custom_call.1} parent=35 // pred_fallthru
          _
        %s376 = sld [smem:[#allocation5 + %s370]]
        %p377 = scmp.eq.s32.totalorder %s376, 1
        %p378 = scmp.eq.s32.totalorder %s376, 2
        %p379 = scmp.eq.s32.totalorder %s376, 3
        %p380 = scmp.eq.s32.totalorder %s376, 4
        %p381 = scmp.eq.s32.totalorder %s376, 5
        %s382 = scalar_select %p381, -0.015625, 0.0
        %s383 = scalar_select %p380, 0.008333334, %s382
        %s384 = scalar_select %p379, 0.004166667, %s383
        %s385 = scalar_select %p378, 0.035714287, %s384
        %s386 = scalar_select %p377, 0.017857144, %s385
        %v387 = vld [vmem:[%s331] sm:$0xff]
        %v388 = vld [vmem:[%s331 + $0x8] sm:$0xff]
        %v389 = vld [vmem:[%s331 + $0x10] sm:$0xff]
        %v390 = vld [vmem:[%s331 + $0x18] sm:$0xff]
        %v391 = vld [vmem:[%s331 + $0x20] sm:$0xff]
        %v392 = vld [vmem:[%s331 + $0x28] sm:$0xff]
        %v393 = vld [vmem:[%s331 + $0x30] sm:$0xff]
        %v394 = vld [vmem:[%s331 + $0x38] sm:$0xff]
        %v395 = vld [vmem:[%s331 + $0x40] sm:$0xff]
        %v396 = vld [vmem:[%s331 + $0x48] sm:$0xff]
        %v397 = vld [vmem:[%s331 + $0x50] sm:$0xff]
        %v398 = vld [vmem:[%s331 + $0x58] sm:$0xff]
        %v399 = vld [vmem:[%s331 + $0x60] sm:$0xff]
        %v400 = vld [vmem:[%s331 + $0x68] sm:$0xff]
        %v401 = vld [vmem:[%s331 + $0x70] sm:$0xff]
        %v402 = vld [vmem:[%s331 + $0x78] sm:$0xff]
        %v403 = vmul.f32 %v387, 0.44444445
        %v404 = vmul.f32 %v388, 0.44444445
        %v405 = vmul.f32 %v389, 0.44444445
        %v406 = vmul.f32 %v390, 0.44444445
        %v407 = vmul.f32 %v391, 0.44444445
        %v408 = vmul.f32 %v392, 0.44444445
        %v409 = vmul.f32 %v393, 0.44444445
        %v410 = vmul.f32 %v394, 0.44444445
        %v411 = vmul.f32 %v395, 0.44444445
        %v412 = vmul.f32 %v396, 0.44444445
        %v413 = vmul.f32 %v397, 0.44444445
        %v414 = vmul.f32 %v398, 0.44444445
        %v415 = vmul.f32 %v399, 0.44444445
        %v416 = vmul.f32 %v400, 0.44444445
        %v417 = vmul.f32 %v401, 0.44444445
        %v418 = vmul.f32 %v402, 0.44444445
        %v419 = vld [vmem:[%s343] sm:$0xff]
        %v420 = vld [vmem:[%s343 + $0x8] sm:$0xff]
        %v421 = vld [vmem:[%s343 + $0x10] sm:$0xff]
        %v422 = vld [vmem:[%s343 + $0x18] sm:$0xff]
        %v423 = vld [vmem:[%s343 + $0x20] sm:$0xff]
        %v424 = vld [vmem:[%s343 + $0x28] sm:$0xff]
        %v425 = vld [vmem:[%s343 + $0x30] sm:$0xff]
        %v426 = vld [vmem:[%s343 + $0x38] sm:$0xff]
        %v427 = vld [vmem:[%s343 + $0x40] sm:$0xff]
        %v428 = vld [vmem:[%s343 + $0x48] sm:$0xff]
        %v429 = vld [vmem:[%s343 + $0x50] sm:$0xff]
        %v430 = vld [vmem:[%s343 + $0x58] sm:$0xff]
        %v431 = vld [vmem:[%s343 + $0x60] sm:$0xff]
        %v432 = vld [vmem:[%s343 + $0x68] sm:$0xff]
        %v433 = vld [vmem:[%s343 + $0x70] sm:$0xff]
        %v434 = vld [vmem:[%s343 + $0x78] sm:$0xff]
        %vm435 = vcmask 261120
        %v437 = vsel %vm435, %v403, 0
        %v440 = vsel %vm435, %v404, 0
        %v443 = vsel %vm435, %v405, 0
        %v446 = vsel %vm435, %v406, 0
        %v449 = vsel %vm435, %v407, 0
        %v452 = vsel %vm435, %v408, 0
        %v455 = vsel %vm435, %v409, 0
        %v458 = vsel %vm435, %v410, 0
        %v461 = vsel %vm435, %v411, 0
        %v464 = vsel %vm435, %v412, 0
        %v467 = vsel %vm435, %v413, 0
        %v470 = vsel %vm435, %v414, 0
        %v473 = vsel %vm435, %v415, 0
        %v476 = vsel %vm435, %v416, 0
        %v479 = vsel %vm435, %v417, 0
        %v482 = vsel %vm435, %v418, 0
        %v485 = vsel %vm435, %v419, 0
        %v488 = vsel %vm435, %v420, 0
        %v491 = vsel %vm435, %v421, 0
        %v494 = vsel %vm435, %v422, 0
        %v497 = vsel %vm435, %v423, 0
        %v500 = vsel %vm435, %v424, 0
        %v503 = vsel %vm435, %v425, 0
        %v506 = vsel %vm435, %v426, 0
        %v509 = vsel %vm435, %v427, 0
        %v512 = vsel %vm435, %v428, 0
        %v515 = vsel %vm435, %v429, 0
        %v518 = vsel %vm435, %v430, 0
        %v521 = vsel %vm435, %v431, 0
        %v524 = vsel %vm435, %v432, 0
        %v527 = vsel %vm435, %v433, 0
        %v530 = vsel %vm435, %v434, 0
        %532 = vmatprep.subr.mxu0 0.0
        %533 = vmatpush1.xpose.msra.mxu0 %v530
        %534 = vmatprep.subr.mxu0 0.0
        %535 = vmatpush1.xpose.msra.mxu0 %v527
        %536 = vmatprep.subr.mxu0 0.0
        %537 = vmatpush1.xpose.msra.mxu0 %v524
        %538 = vmatprep.subr.mxu0 0.0
        %539 = vmatpush1.xpose.msra.mxu0 %v521
        %540 = vmatprep.subr.mxu0 0.0
        %541 = vmatpush1.xpose.msra.mxu0 %v518
        %542 = vmatprep.subr.mxu0 0.0
        %543 = vmatpush1.xpose.msra.mxu0 %v515
        %544 = vmatprep.subr.mxu0 0.0
        %545 = vmatpush1.xpose.msra.mxu0 %v512
        %546 = vmatprep.subr.mxu0 0.0
        %547 = vmatpush1.xpose.msra.mxu0 %v509
        %548 = vmatprep.subr.mxu0 0.0
        %549 = vmatpush1.xpose.msra.mxu0 %v506
        %550 = vmatprep.subr.mxu0 0.0
        %551 = vmatpush1.xpose.msra.mxu0 %v503
        %552 = vmatprep.subr.mxu0 0.0
        %553 = vmatpush1.xpose.msra.mxu0 %v500
        %554 = vmatprep.subr.mxu0 0.0
        %555 = vmatpush1.xpose.msra.mxu0 %v497
        %556 = vmatprep.subr.mxu0 0.0
        %557 = vmatpush1.xpose.msra.mxu0 %v494
        %558 = vmatprep.subr.mxu0 0.0
        %559 = vmatpush1.xpose.msra.mxu0 %v491
        %560 = vmatprep.subr.mxu0 0.0
        %561 = vmatpush1.xpose.msra.mxu0 %v488
        %562 = vmatprep.subr.mxu0 0.0
        %563 = vmatpush1.xpose.msra.mxu0 %v485
        %564 = vmatprep.subr.mxu0 0.0
        %565 = vmatpush2.xpose.msra.mxu0 0.0
        %566 = vmatprep.subr.mxu0 0.0
        %567 = vmatpush2.xpose.msra.mxu0 0.0
        %568 = vmatprep.subr.mxu0 0.0
        %569 = vmatpush2.xpose.msra.mxu0 0.0
        %570 = vmatprep.subr.mxu0 0.0
        %571 = vmatpush2.xpose.msra.mxu0 0.0
        %572 = vmatprep.subr.mxu0 0.0
        %573 = vmatpush2.xpose.msra.mxu0 0.0
        %574 = vmatprep.subr.mxu0 0.0
        %575 = vmatpush2.xpose.msra.mxu0 0.0
        %576 = vmatprep.subr.mxu0 0.0
        %577 = vmatpush2.xpose.msra.mxu0 0.0
        %578 = vmatprep.subr.mxu0 0.0
        %579 = vmatpush2.xpose.msra.mxu0 0.0
        %580 = vmatprep.subr.mxu0 0.0
        %581 = vmatpush2.xpose.msra.mxu0 0.0
        %582 = vmatprep.subr.mxu0 0.0
        %583 = vmatpush2.xpose.msra.mxu0 0.0
        %584 = vmatprep.subr.mxu0 0.0
        %585 = vmatpush2.xpose.msra.mxu0 0.0
        %586 = vmatprep.subr.mxu0 0.0
        %587 = vmatpush2.xpose.msra.mxu0 0.0
        %588 = vmatprep.subr.mxu0 0.0
        %589 = vmatpush2.xpose.msra.mxu0 0.0
        %590 = vmatprep.subr.mxu0 0.0
        %591 = vmatpush2.xpose.msra.mxu0 0.0
        %592 = vmatprep.subr.mxu0 0.0
        %593 = vmatpush2.xpose.msra.mxu0 0.0
        %594 = vmatprep.subr.mxu0 0.0
        %595 = vmatpush2.xpose.msra.mxu0 0.0
        %596 = vmatprep.mubr.f32.mxu0 0.0
        %597 = vmatmul.mubr.f32.gmra.mxu0 %v437
        %v598 = vpop.f32.mrf.mxu0
        %v599 = vadd.f32 0.0, %v598
        %v600 = vpop.f32.mrf.mxu0
        %601 = vmatprep.mubr.f32.mxu0 0.0
        %602 = vmatmul.mubr.f32.gmra.mxu0 %v440
        %v603 = vpop.f32.mrf.mxu0
        %v604 = vadd.f32 0.0, %v603
        %v605 = vpop.f32.mrf.mxu0
        %606 = vmatprep.mubr.f32.mxu0 0.0
        %607 = vmatmul.mubr.f32.gmra.mxu0 %v443
        %v608 = vpop.f32.mrf.mxu0
        %v609 = vadd.f32 0.0, %v608
        %v610 = vpop.f32.mrf.mxu0
        %611 = vmatprep.mubr.f32.mxu0 0.0
        %612 = vmatmul.mubr.f32.gmra.mxu0 %v446
        %v613 = vpop.f32.mrf.mxu0
        %v614 = vadd.f32 0.0, %v613
        %v615 = vpop.f32.mrf.mxu0
        %616 = vmatprep.mubr.f32.mxu0 0.0
        %617 = vmatmul.mubr.f32.gmra.mxu0 %v449
        %v618 = vpop.f32.mrf.mxu0
        %v619 = vadd.f32 0.0, %v618
        %v620 = vpop.f32.mrf.mxu0
        %621 = vmatprep.mubr.f32.mxu0 0.0
        %622 = vmatmul.mubr.f32.gmra.mxu0 %v452
        %v623 = vpop.f32.mrf.mxu0
        %v624 = vadd.f32 0.0, %v623
        %v625 = vpop.f32.mrf.mxu0
        %626 = vmatprep.mubr.f32.mxu0 0.0
        %627 = vmatmul.mubr.f32.gmra.mxu0 %v455
        %v628 = vpop.f32.mrf.mxu0
        %v629 = vadd.f32 0.0, %v628
        %v630 = vpop.f32.mrf.mxu0
        %631 = vmatprep.mubr.f32.mxu0 0.0
        %632 = vmatmul.mubr.f32.gmra.mxu0 %v458
        %v633 = vpop.f32.mrf.mxu0
        %v634 = vadd.f32 0.0, %v633
        %v635 = vpop.f32.mrf.mxu0
        %636 = vmatprep.mubr.f32.mxu0 0.0
        %637 = vmatmul.mubr.f32.gmra.mxu0 %v461
        %v638 = vpop.f32.mrf.mxu0
        %v639 = vadd.f32 0.0, %v638
        %v640 = vpop.f32.mrf.mxu0
        %641 = vmatprep.mubr.f32.mxu0 0.0
        %642 = vmatmul.mubr.f32.gmra.mxu0 %v464
        %v643 = vpop.f32.mrf.mxu0
        %v644 = vadd.f32 0.0, %v643
        %v645 = vpop.f32.mrf.mxu0
        %646 = vmatprep.mubr.f32.mxu0 0.0
        %647 = vmatmul.mubr.f32.gmra.mxu0 %v467
        %v648 = vpop.f32.mrf.mxu0
        %v649 = vadd.f32 0.0, %v648
        %v650 = vpop.f32.mrf.mxu0
        %651 = vmatprep.mubr.f32.mxu0 0.0
        %652 = vmatmul.mubr.f32.gmra.mxu0 %v470
        %v653 = vpop.f32.mrf.mxu0
        %v654 = vadd.f32 0.0, %v653
        %v655 = vpop.f32.mrf.mxu0
        %656 = vmatprep.mubr.f32.mxu0 0.0
        %657 = vmatmul.mubr.f32.gmra.mxu0 %v473
        %v658 = vpop.f32.mrf.mxu0
        %v659 = vadd.f32 0.0, %v658
        %v660 = vpop.f32.mrf.mxu0
        %661 = vmatprep.mubr.f32.mxu0 0.0
        %662 = vmatmul.mubr.f32.gmra.mxu0 %v476
        %v663 = vpop.f32.mrf.mxu0
        %v664 = vadd.f32 0.0, %v663
        %v665 = vpop.f32.mrf.mxu0
        %666 = vmatprep.mubr.f32.mxu0 0.0
        %667 = vmatmul.mubr.f32.gmra.mxu0 %v479
        %v668 = vpop.f32.mrf.mxu0
        %v669 = vadd.f32 0.0, %v668
        %v670 = vpop.f32.mrf.mxu0
        %671 = vmatprep.mubr.f32.mxu0 0.0
        %672 = vmatmul.mubr.f32.gmra.mxu0 %v482
        %v673 = vpop.f32.mrf.mxu0
        %v674 = vadd.f32 0.0, %v673
        %v675 = vpop.f32.mrf.mxu0
        %676 = vdwg.mxu0
        %v677 = vld [vmem:[%s355] sm:$0xff]
        %v678 = vld [vmem:[%s355 + $0x8] sm:$0xff]
        %v679 = vld [vmem:[%s355 + $0x10] sm:$0xff]
        %v680 = vld [vmem:[%s355 + $0x18] sm:$0xff]
        %v681 = vld [vmem:[%s355 + $0x20] sm:$0xff]
        %v682 = vld [vmem:[%s355 + $0x28] sm:$0xff]
        %v683 = vld [vmem:[%s355 + $0x30] sm:$0xff]
        %v684 = vld [vmem:[%s355 + $0x38] sm:$0xff]
        %v685 = vld [vmem:[%s355 + $0x40] sm:$0xff]
        %v686 = vld [vmem:[%s355 + $0x48] sm:$0xff]
        %v687 = vld [vmem:[%s355 + $0x50] sm:$0xff]
        %v688 = vld [vmem:[%s355 + $0x58] sm:$0xff]
        %v689 = vld [vmem:[%s355 + $0x60] sm:$0xff]
        %v690 = vld [vmem:[%s355 + $0x68] sm:$0xff]
        %v691 = vld [vmem:[%s355 + $0x70] sm:$0xff]
        %v692 = vld [vmem:[%s355 + $0x78] sm:$0xff]
        %694 = vset.pattern.permute.xlu0 0
        %695 = vperm.xlu0 %694, %v677
        %v696 = vpop.permute.xlu0 %695
        %699 = vset.pattern.permute.xlu0 0
        %700 = vperm.xlu0 %699, %v678
        %v701 = vpop.permute.xlu0 %700
        %704 = vset.pattern.permute.xlu0 0
        %705 = vperm.xlu0 %704, %v679
        %v706 = vpop.permute.xlu0 %705
        %709 = vset.pattern.permute.xlu0 0
        %710 = vperm.xlu0 %709, %v680
        %v711 = vpop.permute.xlu0 %710
        %714 = vset.pattern.permute.xlu0 0
        %715 = vperm.xlu0 %714, %v681
        %v716 = vpop.permute.xlu0 %715
        %719 = vset.pattern.permute.xlu0 0
        %720 = vperm.xlu0 %719, %v682
        %v721 = vpop.permute.xlu0 %720
        %724 = vset.pattern.permute.xlu0 0
        %725 = vperm.xlu0 %724, %v683
        %v726 = vpop.permute.xlu0 %725
        %729 = vset.pattern.permute.xlu0 0
        %730 = vperm.xlu0 %729, %v684
        %v731 = vpop.permute.xlu0 %730
        %734 = vset.pattern.permute.xlu0 0
        %735 = vperm.xlu0 %734, %v685
        %v736 = vpop.permute.xlu0 %735
        %739 = vset.pattern.permute.xlu0 0
        %740 = vperm.xlu0 %739, %v686
        %v741 = vpop.permute.xlu0 %740
        %744 = vset.pattern.permute.xlu0 0
        %745 = vperm.xlu0 %744, %v687
        %v746 = vpop.permute.xlu0 %745
        %749 = vset.pattern.permute.xlu0 0
        %750 = vperm.xlu0 %749, %v688
        %v751 = vpop.permute.xlu0 %750
        %754 = vset.pattern.permute.xlu0 0
        %755 = vperm.xlu0 %754, %v689
        %v756 = vpop.permute.xlu0 %755
        %759 = vset.pattern.permute.xlu0 0
        %760 = vperm.xlu0 %759, %v690
        %v761 = vpop.permute.xlu0 %760
        %764 = vset.pattern.permute.xlu0 0
        %765 = vperm.xlu0 %764, %v691
        %v766 = vpop.permute.xlu0 %765
        %769 = vset.pattern.permute.xlu0 0
        %770 = vperm.xlu0 %769, %v692
        %v771 = vpop.permute.xlu0 %770
        %v773 = vsub.f32 %v599, %v696
        %v774 = vsub.f32 %v604, %v701
        %v775 = vsub.f32 %v609, %v706
        %v776 = vsub.f32 %v614, %v711
        %v777 = vsub.f32 %v619, %v716
        %v778 = vsub.f32 %v624, %v721
        %v779 = vsub.f32 %v629, %v726
        %v780 = vsub.f32 %v634, %v731
        %v781 = vsub.f32 %v639, %v736
        %v782 = vsub.f32 %v644, %v741
        %v783 = vsub.f32 %v649, %v746
        %v784 = vsub.f32 %v654, %v751
        %v785 = vsub.f32 %v659, %v756
        %v786 = vsub.f32 %v664, %v761
        %v787 = vsub.f32 %v669, %v766
        %v788 = vsub.f32 %v674, %v771
        %v789 = vld [vmem:[%s365] sm:$0x1]
        %v791 = vlaneseq
        %v792 = vshrl.u32 %v791, 7
        %v793 = vsub.s32 0, %v792
        %v794 = vrot.slane %v789, %v793
        %v796 = vsub.f32 %v773, %v794
        %v797 = vsub.f32 %v774, %v794
        %v798 = vsub.f32 %v775, %v794
        %v799 = vsub.f32 %v776, %v794
        %v800 = vsub.f32 %v777, %v794
        %v801 = vsub.f32 %v778, %v794
        %v802 = vsub.f32 %v779, %v794
        %v803 = vsub.f32 %v780, %v794
        %v804 = vsub.f32 %v781, %v794
        %v805 = vsub.f32 %v782, %v794
        %v806 = vsub.f32 %v783, %v794
        %v807 = vsub.f32 %v784, %v794
        %v808 = vsub.f32 %v785, %v794
        %v809 = vsub.f32 %v786, %v794
        %v810 = vsub.f32 %v787, %v794
        %v811 = vsub.f32 %v788, %v794
        %v812 = vmin.f32 %v796, 0.0
        %v813 = vmin.f32 %v797, 0.0
        %v814 = vmin.f32 %v798, 0.0
        %v815 = vmin.f32 %v799, 0.0
        %v816 = vmin.f32 %v800, 0.0
        %v817 = vmin.f32 %v801, 0.0
        %v818 = vmin.f32 %v802, 0.0
        %v819 = vmin.f32 %v803, 0.0
        %v820 = vmin.f32 %v804, 0.0
        %v821 = vmin.f32 %v805, 0.0
        %v822 = vmin.f32 %v806, 0.0
        %v823 = vmin.f32 %v807, 0.0
        %v824 = vmin.f32 %v808, 0.0
        %v825 = vmin.f32 %v809, 0.0
        %v826 = vmin.f32 %v810, 0.0
        %v827 = vmin.f32 %v811, 0.0
        %v828 = vmul.f32 %v812, 1.442695
        %v829 = vpow.pop %v828
        %v830 = vmul.f32 %v813, 1.442695
        %v831 = vpow.pop %v830
        %v832 = vmul.f32 %v814, 1.442695
        %v833 = vpow.pop %v832
        %v834 = vmul.f32 %v815, 1.442695
        %v835 = vpow.pop %v834
        %v836 = vmul.f32 %v816, 1.442695
        %v837 = vpow.pop %v836
        %v838 = vmul.f32 %v817, 1.442695
        %v839 = vpow.pop %v838
        %v840 = vmul.f32 %v818, 1.442695
        %v841 = vpow.pop %v840
        %v842 = vmul.f32 %v819, 1.442695
        %v843 = vpow.pop %v842
        %v844 = vmul.f32 %v820, 1.442695
        %v845 = vpow.pop %v844
        %v846 = vmul.f32 %v821, 1.442695
        %v847 = vpow.pop %v846
        %v848 = vmul.f32 %v822, 1.442695
        %v849 = vpow.pop %v848
        %v850 = vmul.f32 %v823, 1.442695
        %v851 = vpow.pop %v850
        %v852 = vmul.f32 %v824, 1.442695
        %v853 = vpow.pop %v852
        %v854 = vmul.f32 %v825, 1.442695
        %v855 = vpow.pop %v854
        %v856 = vmul.f32 %v826, 1.442695
        %v857 = vpow.pop %v856
        %v858 = vmul.f32 %v827, 1.442695
        %v859 = vpow.pop %v858
        %v860 = vadd.f32 %v829, %v831
        %v861 = vadd.f32 %v860, %v833
        %v862 = vadd.f32 %v861, %v835
        %v863 = vadd.f32 %v862, %v837
        %v864 = vadd.f32 %v863, %v839
        %v865 = vadd.f32 %v864, %v841
        %v866 = vadd.f32 %v865, %v843
        %v867 = vadd.f32 %v866, %v845
        %v868 = vadd.f32 %v867, %v847
        %v869 = vadd.f32 %v868, %v849
        %v870 = vadd.f32 %v869, %v851
        %v871 = vadd.f32 %v870, %v853
        %v872 = vadd.f32 %v871, %v855
        %v873 = vadd.f32 %v872, %v857
        %v874 = vadd.f32 %v873, %v859
        %v875 = vld [vmem:[%s323] sm:$0xff]
        %v876 = vstv %s386
        %v877 = vmul.f32 %v876, %v874
        %v878 = vadd.f32 %v875, %v877
        %879 = vst [vmem:[%s323] sm:$0xff] %v878
        %s880 = sand.u32 %s183, 1
        %s881 = scalar_lea.sflag [#allocation7], %s880
        %s882 = sand.u32 %s183, 1
        %s883 = smul.addr %s882, 8
        %s884 = scalar_lea.vmem [#allocation6], %s883
        // Predicated region
        $region41: #{tpu_custom_call.1} parent=35 // pred_check
          %p885 = pneg %p193
        $region42: #{tpu_custom_call.1} parent=35 // pred_check_branch
          %887 = sbr.rel (%p885) target = $region44
        $region43: #{tpu_custom_call.1} parent=35 // pred_region
          %s889 = ssub.s32 128, 128
          %890 = vsyncadd %s881, %s889
          %s891 = smul.addr %s39, 128
          %s892 = scalar_lea.hbm %s7, %s891
          %s894 = sshll.u32 %s884, 4
          %s895 = int_to_ptr.vmem [resolvable:$true] %s894
          %897 = dma.vmem_to_hbm [thread:$0]  %s895, 128, %s892, %s881
        $region44: #{tpu_custom_call.1} parent=35 // pred_fallthru
          _
      $region36: #{tpu_custom_call.1} parent=5 // pred_fallthru
        _
      %p898 = scmp.le.s32.totalorder 2, %s30
      // Predicated region
      $region45: #{tpu_custom_call.1} parent=5 // pred_check
        %p899 = pneg %p898
      $region46: #{tpu_custom_call.1} parent=5 // pred_check_branch
        %901 = sbr.rel (%p899) target = $region48
      $region47: #{tpu_custom_call.1} parent=5 // pred_region
        %s902 = ssub.s32 %s30, 2
        // Predicated region
        $region49: #{tpu_custom_call.1} parent=47 // pred_check
          %p903 = pneg %p199
        $region50: #{tpu_custom_call.1} parent=47 // pred_check_branch
          %905 = sbr.rel (%p903) target = $region52
        $region51: #{tpu_custom_call.1} parent=47 // pred_region
          %s906 = sand.u32 %s184, 1
          %s907 = scalar_lea.sflag [#allocation7], %s906
          %s908 = sand.u32 %s184, 1
          %s909 = smul.addr %s908, 8
          %s910 = scalar_lea.vmem [#allocation6], %s909
          %911 = dma.done %s907, 128
        $region52: #{tpu_custom_call.1} parent=47 // pred_fallthru
          _
      $region48: #{tpu_custom_call.1} parent=5 // pred_fallthru
        _
    $region6: #{tpu_custom_call.1} parent=1 // loop_footer
      %s34 = sadd.s32 1, %s30
    $region7: #{tpu_custom_call.1} parent=1 // loop_footer_branch
      %29 = sbr.rel target = $region3
    $region8: #{tpu_custom_call.1} parent=1 // loop_exit
      _
    %912 = vsyncpa [#allocation7], 1
    %s913 = scalar_lea.sflag [#allocation7], 1
    %914 = vsyncpa %s913, 1

</llo_original>
